<compile_context>
chip_gen: v5e
topology: v5e:2x2
jax: 0.10.0
libtpu: 0.0.40
codegen_flags: <defaults>
</compile_context>

<pallas_src>
import functools

import jax
import jax.numpy as jnp
from jax import lax
from jax.experimental import pallas as pl
from jax.experimental.pallas import tpu as pltpu

LN_EPS = 1e-5
_INV_SQRT2 = 0.7071067811865476
_SQRT_2_OVER_PI = 0.7978845608028654


def _skip_kernel(x_enc_ref, x_dec_ref, w1_ref, b1_ref, w2_ref, b2_ref, out_ref,
                 *, approximate_gelu: bool):
    # ---- LayerNorm over last dim (biased variance, like torch.nn.LayerNorm) in f32 ----
    # The affine (gamma, beta) has been folded into w1/b1 at wrapper level.
    x = x_enc_ref[...].astype(jnp.float32)
    mean = jnp.mean(x, axis=-1, keepdims=True)
    centered = x - mean
    var = jnp.mean(centered * centered, axis=-1, keepdims=True)
    xn = centered * lax.rsqrt(var + LN_EPS)

    # ---- Linear 1 (LN affine pre-folded): bf16 operands, f32 accumulation on the MXU ----
    h = jnp.dot(xn.astype(w1_ref.dtype), w1_ref[...],
                preferred_element_type=jnp.float32) + b1_ref[...]

    # ---- GELU ----
    if approximate_gelu:
        # tanh form -> EUP (separate VLIW slot), effectively free under the MXU.
        h = 0.5 * h * (1.0 + jnp.tanh(
            jnp.float32(_SQRT_2_OVER_PI) * (h + 0.044715 * h * h * h)))
    else:
        # exact erf form, matching nn.GELU() default semantics.
        h = 0.5 * h * (1.0 + lax.erf(h * jnp.float32(_INV_SQRT2)))

    # ---- Linear 2: bf16 operands, f32 accumulation ----
    y = jnp.dot(h.astype(w2_ref.dtype), w2_ref[...],
                preferred_element_type=jnp.float32) + b2_ref[...]

    # ---- Residual add with decoder features ----
    out_ref[...] = (x_dec_ref[...].astype(jnp.float32) + y).astype(out_ref.dtype)


def _vmem_capacity_bytes():
    try:
        return int(pltpu.get_tpu_info().vmem_capacity_bytes)
    except Exception:
        return 64 << 20  # conservative fallback (v7x per-TC)


def skip_connection(x_encoder, x_decoder, params, *, tm=None,
                    matmul_dtype=jnp.bfloat16, approximate_gelu=False):
    """x_encoder, x_decoder: (B, N, D). params: dict of LN/Linear weights."""
    B, N, D = x_encoder.shape
    T = B * N

    phys_vmem = _vmem_capacity_bytes()
    if tm is None:
        # 512 tokens/tile on 128 MiB-VMEM chips (v5e/v6e), 256 on v7x (64 MiB/TC).
        tm = 512 if phys_vmem >= (96 << 20) else 256
    # Never make the tile bigger than the (8-row aligned) token count: avoids computing
    # redundant padded rows on small problems while keeping the sublane constraint.
    tm = min(tm, max(8, pl.cdiv(T, 8) * 8))

    T_pad = pl.cdiv(T, tm) * tm
    xe = x_encoder.reshape(T, D)
    xd = x_decoder.reshape(T, D)
    if T_pad != T:  # only pad when the token count is ragged w.r.t. the tile
        pad = ((0, T_pad - T), (0, 0))
        xe = jnp.pad(xe, pad)
        xd = jnp.pad(xd, pad)

    # ---- Fold the LayerNorm affine into the first Linear (exact, done once in f32) ----
    f32 = jnp.float32
    gamma = params["ln_gamma"].astype(f32)
    beta = params["ln_beta"].astype(f32)
    w1_f32 = params["w1t"].astype(f32)
    w1 = (gamma[:, None] * w1_f32).astype(matmul_dtype)
    b1 = (beta @ w1_f32 + params["b1"].astype(f32)).reshape(1, D)
    w2 = params["w2t"].astype(matmul_dtype)
    b2 = params["b2"].astype(f32).reshape(1, D)

    # Grid-invariant operands: single-buffer them (index_map is constant, a second
    # buffer is pure VMEM waste -- critical on v7x's 64 MiB/TC).
    single = pl.Buffered(1)
    tok_spec = pl.BlockSpec((tm, D), lambda i: (i, 0))
    row_spec = pl.BlockSpec((1, D), lambda i: (0, 0), pipeline_mode=single)
    mat_spec = pl.BlockSpec((D, D), lambda i: (0, 0), pipeline_mode=single)

    # ---- VMEM budget ----
    io_itemsize = jnp.dtype(x_decoder.dtype).itemsize
    w_itemsize = jnp.dtype(matmul_dtype).itemsize
    tok_tile_bytes = tm * D * io_itemsize
    weight_bytes = 2 * D * D * w_itemsize          # w1 + w2, single-buffered
    interm_bytes = 6 * tm * D * 4                  # f32 intermediates (x, centered, xn, h, y, ...)
    vmem_bytes = (2 * 3 * tok_tile_bytes           # xe / xd / out, double-buffered
                  + weight_bytes
                  + 2 * D * 4                      # b1 / b2
                  + interm_bytes
                  + (2 << 20))                     # misc scratch headroom
    hard_cap = int(phys_vmem * 0.8)                # leave ~20% for Mosaic internals
    vmem_bytes = int(min(max(vmem_bytes, min(32 << 20, hard_cap)), hard_cap))

    cost = pl.CostEstimate(
        flops=2 * 2 * T_pad * D * D,                                  # two (tm,D)x(D,D) matmuls
        transcendentals=T_pad * D,                                    # erf / tanh
        bytes_accessed=3 * T_pad * D * io_itemsize + weight_bytes,
    )

    kernel = functools.partial(_skip_kernel, approximate_gelu=approximate_gelu)

    out = pl.pallas_call(
        kernel,
        out_shape=jax.ShapeDtypeStruct((T_pad, D), x_decoder.dtype),
        grid_spec=pltpu.PrefetchScalarGridSpec(
            num_scalar_prefetch=0,
            grid=(T_pad // tm,),
            in_specs=[tok_spec, tok_spec, mat_spec, row_spec, mat_spec, row_spec],
            out_specs=tok_spec,
        ),
        compiler_params=pltpu.CompilerParams(
            dimension_semantics=("parallel",),   # token axis shards across TCs on v7x
            vmem_limit_bytes=vmem_bytes,
        ),
        cost_estimate=cost,
    )(xe, xd, w1, b1, w2, b2)

    if T_pad != T:
        out = out[:T]
    return out.reshape(B, N, D)


def init_params(key, dim, dtype=jnp.float32):
    k1, k2, k3, k4 = jax.random.split(key, 4)
    scale = 1.0 / jnp.sqrt(jnp.float32(dim))
    return {
        "ln_gamma": jnp.ones((dim,), dtype),
        "ln_beta": jnp.zeros((dim,), dtype),
        # Stored transposed relative to torch's (out, in) layout -> y = x @ W^T + b.
        "w1t": (jax.random.uniform(k1, (dim, dim), dtype, -1.0, 1.0) * scale),
        "b1": (jax.random.uniform(k2, (dim,), dtype, -1.0, 1.0) * scale),
        "w2t": (jax.random.uniform(k3, (dim, dim), dtype, -1.0, 1.0) * scale),
        "b2": (jax.random.uniform(k4, (dim,), dtype, -1.0, 1.0) * scale),
    }


def _reference(x_encoder, x_decoder, params):
    x = x_encoder.astype(jnp.float32)
    mean = jnp.mean(x, axis=-1, keepdims=True)
    var = jnp.mean((x - mean) ** 2, axis=-1, keepdims=True)
    xn = (x - mean) / jnp.sqrt(var + LN_EPS)
    xn = xn * params["ln_gamma"] + params["ln_beta"]
    h = xn @ params["w1t"] + params["b1"]
    h = 0.5 * h * (1.0 + lax.erf(h / jnp.sqrt(2.0)))
    y = h @ params["w2t"] + params["b2"]
    return x_decoder.astype(jnp.float32) + y


if __name__ == "__main__":
    key = jax.random.PRNGKey(0)
    k_enc, k_dec, k_par = jax.random.split(key, 3)

    B, N, D = 2, 8, 128   # batch, tokens, embedding dim
    x_encoder = jax.random.normal(k_enc, (B, N, D), jnp.float32)
    x_decoder = jax.random.normal(k_dec, (B, N, D), jnp.float32)
    params = init_params(k_par, D)

    ref = _reference(x_encoder, x_decoder, params)

    # Fast path: bf16 matmul operands, f32 accumulation, exact-erf GELU.
    out_bf16 = jax.block_until_ready(skip_connection(x_encoder, x_decoder, params))
    assert out_bf16.shape == (B, N, D)
    assert jnp.allclose(out_bf16, ref, atol=2e-2, rtol=2e-2), "bf16 path mismatch vs reference"

    # Full-precision path for a tight numerical check.
    out_f32 = jax.block_until_ready(
        skip_connection(x_encoder, x_decoder, params, matmul_dtype=jnp.float32))
    assert jnp.allclose(out_f32, ref, atol=1e-4, rtol=1e-4), "f32 path mismatch vs reference"

    # Optional EUP-GELU path (tanh approx) -- loose tolerance vs the erf reference.
    out_tanh = jax.block_until_ready(
        skip_connection(x_encoder, x_decoder, params, matmul_dtype=jnp.float32,
                        approximate_gelu=True))
    assert jnp.allclose(out_tanh, ref, atol=5e-2, rtol=5e-2), "tanh-GELU path mismatch"

    print("KERNEL_OK")
</pallas_src>

<mosaic_0001>
module attributes {stable_mosaic.version = 11 : i64} {
  func.func @_skip_kernel(%arg0: i32, %arg1: memref<16x128xf32, #tpu.memory_space<vmem>>, %arg2: memref<16x128xf32, #tpu.memory_space<vmem>>, %arg3: memref<128x128xbf16, #tpu.memory_space<vmem>>, %arg4: memref<1x128xf32, #tpu.memory_space<vmem>>, %arg5: memref<128x128xbf16, #tpu.memory_space<vmem>>, %arg6: memref<1x128xf32, #tpu.memory_space<vmem>>, %arg7: memref<16x128xf32, #tpu.memory_space<vmem>>) attributes {dimension_semantics = [#tpu.dimension_semantics<parallel>], iteration_bounds = array<i64: 1>, scalar_prefetch = 0 : i64, scratch_operands = 0 : i64, tpu.core_type = #tpu.core_type<tc>, window_params = [{transform_indices = @transform_0, window_bounds = array<i64: 16, 128>}, {transform_indices = @transform_1, window_bounds = array<i64: 16, 128>}, {pipeline_mode = #tpu.pipeline_mode<synchronous>, transform_indices = @transform_2, window_bounds = array<i64: 128, 128>}, {pipeline_mode = #tpu.pipeline_mode<synchronous>, transform_indices = @transform_3, window_bounds = array<i64: 1, 128>}, {pipeline_mode = #tpu.pipeline_mode<synchronous>, transform_indices = @transform_4, window_bounds = array<i64: 128, 128>}, {pipeline_mode = #tpu.pipeline_mode<synchronous>, transform_indices = @transform_5, window_bounds = array<i64: 1, 128>}, {transform_indices = @transform_6, window_bounds = array<i64: 16, 128>}]} {
    %c0 = arith.constant 0 : index
    %c0_0 = arith.constant 0 : index
    %0 = vector.load %arg1[%c0, %c0_0] : memref<16x128xf32, #tpu.memory_space<vmem>>, vector<16x128xf32>
    %cst = arith.constant dense<0.000000e+00> : vector<16xf32>
    %1 = vector.multi_reduction <add>, %0, %cst [1] : vector<16x128xf32> to vector<16xf32>
    %2 = vector.shape_cast %1 : vector<16xf32> to vector<16x1xf32>
    %cst_1 = arith.constant 1.280000e+02 : f32
    %3 = vector.broadcast %cst_1 : f32 to vector<16x1xf32>
    %4 = arith.divf %2, %3 : vector<16x1xf32>
    %5 = vector.broadcast %4 : vector<16x1xf32> to vector<16x128xf32>
    %6 = arith.subf %0, %5 : vector<16x128xf32>
    %7 = arith.mulf %6, %6 : vector<16x128xf32>
    %cst_2 = arith.constant dense<0.000000e+00> : vector<16xf32>
    %8 = vector.multi_reduction <add>, %7, %cst_2 [1] : vector<16x128xf32> to vector<16xf32>
    %9 = vector.shape_cast %8 : vector<16xf32> to vector<16x1xf32>
    %cst_3 = arith.constant 1.280000e+02 : f32
    %10 = vector.broadcast %cst_3 : f32 to vector<16x1xf32>
    %11 = arith.divf %9, %10 : vector<16x1xf32>
    %cst_4 = arith.constant 9.99999974E-6 : f32
    %12 = vector.broadcast %cst_4 : f32 to vector<16x1xf32>
    %13 = arith.addf %11, %12 : vector<16x1xf32>
    %14 = math.rsqrt %13 : vector<16x1xf32>
    %15 = vector.broadcast %14 : vector<16x1xf32> to vector<16x128xf32>
    %16 = arith.mulf %6, %15 : vector<16x128xf32>
    %17 = arith.truncf %16 : vector<16x128xf32> to vector<16x128xbf16>
    %c0_5 = arith.constant 0 : index
    %c0_6 = arith.constant 0 : index
    %18 = vector.load %arg3[%c0_5, %c0_6] : memref<128x128xbf16, #tpu.memory_space<vmem>>, vector<128x128xbf16>
    %cst_7 = arith.constant dense<0.000000e+00> : vector<16x128xf32>
    %19 = tpu.matmul %17, %18, %cst_7 {dimension_numbers = #tpu.dot_dimension_numbers<[1], [0], [0], [1], [0, 0, 1, 1], [], []>} : vector<16x128xbf16>, vector<128x128xbf16>, vector<16x128xf32> -> vector<16x128xf32>
    %c0_8 = arith.constant 0 : index
    %c0_9 = arith.constant 0 : index
    %20 = vector.load %arg4[%c0_8, %c0_9] : memref<1x128xf32, #tpu.memory_space<vmem>>, vector<1x128xf32>
    %21 = vector.broadcast %20 : vector<1x128xf32> to vector<16x128xf32>
    %22 = arith.addf %19, %21 : vector<16x128xf32>
    %cst_10 = arith.constant 5.000000e-01 : f32
    %23 = vector.broadcast %cst_10 : f32 to vector<16x128xf32>
    %24 = arith.mulf %23, %22 : vector<16x128xf32>
    %cst_11 = arith.constant 0.707106769 : f32
    %25 = vector.broadcast %cst_11 : f32 to vector<16x128xf32>
    %26 = arith.mulf %22, %25 : vector<16x128xf32>
    %27 = math.erf %26 : vector<16x128xf32>
    %cst_12 = arith.constant 1.000000e+00 : f32
    %28 = vector.broadcast %cst_12 : f32 to vector<16x128xf32>
    %29 = arith.addf %28, %27 : vector<16x128xf32>
    %30 = arith.mulf %24, %29 : vector<16x128xf32>
    %31 = arith.truncf %30 : vector<16x128xf32> to vector<16x128xbf16>
    %c0_13 = arith.constant 0 : index
    %c0_14 = arith.constant 0 : index
    %32 = vector.load %arg5[%c0_13, %c0_14] : memref<128x128xbf16, #tpu.memory_space<vmem>>, vector<128x128xbf16>
    %cst_15 = arith.constant dense<0.000000e+00> : vector<16x128xf32>
    %33 = tpu.matmul %31, %32, %cst_15 {dimension_numbers = #tpu.dot_dimension_numbers<[1], [0], [0], [1], [0, 0, 1, 1], [], []>} : vector<16x128xbf16>, vector<128x128xbf16>, vector<16x128xf32> -> vector<16x128xf32>
    %c0_16 = arith.constant 0 : index
    %c0_17 = arith.constant 0 : index
    %34 = vector.load %arg6[%c0_16, %c0_17] : memref<1x128xf32, #tpu.memory_space<vmem>>, vector<1x128xf32>
    %35 = vector.broadcast %34 : vector<1x128xf32> to vector<16x128xf32>
    %36 = arith.addf %33, %35 : vector<16x128xf32>
    %c0_18 = arith.constant 0 : index
    %c0_19 = arith.constant 0 : index
    %37 = vector.load %arg2[%c0_18, %c0_19] : memref<16x128xf32, #tpu.memory_space<vmem>>, vector<16x128xf32>
    %38 = arith.addf %37, %36 : vector<16x128xf32>
    %c0_20 = arith.constant 0 : index
    %c0_21 = arith.constant 0 : index
    %39 = vector.load %arg7[%c0_20, %c0_21] : memref<16x128xf32, #tpu.memory_space<vmem>>, vector<16x128xf32>
    tpu.vector_store %arg7[%c0_20, %c0_21], %38 {strides = array<i32>} : memref<16x128xf32, #tpu.memory_space<vmem>>, vector<16x128xf32>,
    return
  }
  func.func @transform_0(%arg0: i32) -> (i32, i32) {
    %c0_i32 = arith.constant 0 : i32
    %c0_i32_0 = arith.constant 0 : i32
    return %arg0, %c0_i32 : i32, i32
  }
  func.func @transform_1(%arg0: i32) -> (i32, i32) {
    %c0_i32 = arith.constant 0 : i32
    %c0_i32_0 = arith.constant 0 : i32
    return %arg0, %c0_i32 : i32, i32
  }
  func.func @transform_2(%arg0: i32) -> (i32, i32) {
    %c0_i32 = arith.constant 0 : i32
    %c0_i32_0 = arith.constant 0 : i32
    %c0_i32_1 = arith.constant 0 : i32
    return %c0_i32, %c0_i32_0 : i32, i32
  }
  func.func @transform_3(%arg0: i32) -> (i32, i32) {
    %c0_i32 = arith.constant 0 : i32
    %c0_i32_0 = arith.constant 0 : i32
    %c0_i32_1 = arith.constant 0 : i32
    return %c0_i32, %c0_i32_0 : i32, i32
  }
  func.func @transform_4(%arg0: i32) -> (i32, i32) {
    %c0_i32 = arith.constant 0 : i32
    %c0_i32_0 = arith.constant 0 : i32
    %c0_i32_1 = arith.constant 0 : i32
    return %c0_i32, %c0_i32_0 : i32, i32
  }
  func.func @transform_5(%arg0: i32) -> (i32, i32) {
    %c0_i32 = arith.constant 0 : i32
    %c0_i32_0 = arith.constant 0 : i32
    %c0_i32_1 = arith.constant 0 : i32
    return %c0_i32, %c0_i32_0 : i32, i32
  }
  func.func @transform_6(%arg0: i32) -> (i32, i32) {
    %c0_i32 = arith.constant 0 : i32
    %c0_i32_0 = arith.constant 0 : i32
    return %arg0, %c0_i32 : i32, i32
  }
}

</mosaic_0001>

<llo_original>
// kernel: tpu_custom_call.1
$region0: #{tpu_custom_call.1}
  #allocation0 [shape = 'u32[]', space=smem, size = 0x4, offset = 0x4, fixed_abs, tag = 'smem constant byte address 0x4 - core index']
  #allocation1 [shape = 'u32[72,128]{1,0:T(1,128)}', space=vmem, size = 0x9000, scoped, tag = 'internal scratch']
  %s0 = inlined_call_operand.hbm [shape: f32[16,128], index: 0, kind: input, shape index: {}]
  %s1 = inlined_call_operand.hbm [shape: f32[16,128], index: 1, kind: input, shape index: {}]
  %s2 = inlined_call_operand.hbm [shape: bf16[128,128], index: 2, kind: input, shape index: {}]
  %s3 = inlined_call_operand.vmem [shape: f32[1,128], index: 3, kind: input, shape index: {}]
  %s4 = inlined_call_operand.hbm [shape: bf16[128,128], index: 4, kind: input, shape index: {}]
  %s5 = inlined_call_operand.vmem [shape: f32[1,128], index: 5, kind: input, shape index: {}]
  %s6 = inlined_call_operand.hbm [shape: f32[16,128], index: 6, kind: output, shape index: {}]
  %s7 = sld [smem:[#allocation0]]
  $region50: #{tpu_custom_call.1} parent=0
    _
  %s9 = ssub.s32 1, %s7
  %s10 = scalar_select 0, %s9, %s7
  $region1: #{tpu_custom_call.1} parent=0
    #allocation2 [shape = 'u8[8192]{0}', space=vmem, size = 0x2000, scoped, tag = 'input window, operand 0, single buffered']
    #allocation3 [shape = 's32[1]{0}', space=sflag, size = 0x4, scoped, tag = 'scoped memory for tpu_custom_call.1']
    #allocation4 [shape = 's32[1]{0}', space=sflag, size = 0x4, scoped, tag = 'scoped memory for tpu_custom_call.1']
    #allocation5 [shape = 'u8[8192]{0}', space=vmem, size = 0x2000, scoped, tag = 'input window, operand 1, single buffered']
    #allocation6 [shape = 's32[1]{0}', space=sflag, size = 0x4, scoped, tag = 'scoped memory for tpu_custom_call.1']
    #allocation7 [shape = 'u8[32768]{0}', space=vmem, size = 0x8000, scoped, tag = 'input window, operand 2, single buffered']
    #allocation8 [shape = 'u8[32768]{0}', space=vmem, size = 0x8000, scoped, tag = 'input window, operand 4, single buffered']
    #allocation9 [shape = 's32[1]{0}', space=sflag, size = 0x4, scoped, tag = 'scoped memory for tpu_custom_call.1']
    #allocation10 [shape = 'u8[8192]{0}', space=vmem, size = 0x2000, scoped, tag = 'output window, operand 0, single buffered']
    %11 = vsyncpa [#allocation3], 0
    %12 = vsyncpa [#allocation6], 0
    %13 = vsyncpa [#allocation9], 0
    %14 = vsyncpa [#allocation4], 0
    // Predicated region
    $region2: #{tpu_custom_call.1} parent=1 // pred_check
      _
    $region3: #{tpu_custom_call.1} parent=1 // pred_check_branch
      %16 = sbr.rel (0) target = $region5
    $region4: #{tpu_custom_call.1} parent=1 // pred_region
      %18 = vsyncadd [#allocation3], 0
      %s19 = sshll.u32 %s0, 4
      %s20 = int_to_ptr.hbm [resolvable:$true] %s19
      %s21 = sshll.u32 [#allocation2], 4
      %s22 = int_to_ptr.vmem [resolvable:$true] %s21
      %27 = dma.hbm_to_vmem [thread:$0]  %s20, 256, %s22, [#allocation3], 128, 128, 8
    $region5: #{tpu_custom_call.1} parent=1 // pred_fallthru
      _
    // Predicated region
    $region6: #{tpu_custom_call.1} parent=1 // pred_check
      _
    $region7: #{tpu_custom_call.1} parent=1 // pred_check_branch
      %29 = sbr.rel (0) target = $region9
    $region8: #{tpu_custom_call.1} parent=1 // pred_region
      %31 = vsyncadd [#allocation6], 0
      %s32 = sshll.u32 %s1, 4
      %s33 = int_to_ptr.hbm [resolvable:$true] %s32
      %s34 = sshll.u32 [#allocation5], 4
      %s35 = int_to_ptr.vmem [resolvable:$true] %s34
      %40 = dma.hbm_to_vmem [thread:$0]  %s33, 256, %s35, [#allocation6], 128, 128, 8
    $region9: #{tpu_custom_call.1} parent=1 // pred_fallthru
      _
    // Predicated region
    $region10: #{tpu_custom_call.1} parent=1 // pred_check
      _
    $region11: #{tpu_custom_call.1} parent=1 // pred_check_branch
      %42 = sbr.rel (0) target = $region13
    $region12: #{tpu_custom_call.1} parent=1 // pred_region
      %44 = vsyncadd [#allocation6], 0
      %s45 = sshll.u32 %s2, 4
      %s46 = int_to_ptr.hbm [resolvable:$true] %s45
      %s47 = sshll.u32 [#allocation7], 4
      %s48 = int_to_ptr.vmem [resolvable:$true] %s47
      %53 = dma.hbm_to_vmem [thread:$0]  %s46, 1024, %s48, [#allocation6], 64, 64, 4
    $region13: #{tpu_custom_call.1} parent=1 // pred_fallthru
      _
    // Predicated region
    $region14: #{tpu_custom_call.1} parent=1 // pred_check
      _
    $region15: #{tpu_custom_call.1} parent=1 // pred_check_branch
      %55 = sbr.rel (0) target = $region17
    $region16: #{tpu_custom_call.1} parent=1 // pred_region
      _
    $region17: #{tpu_custom_call.1} parent=1 // pred_fallthru
      _
    // Predicated region
    $region18: #{tpu_custom_call.1} parent=1 // pred_check
      _
    $region19: #{tpu_custom_call.1} parent=1 // pred_check_branch
      %57 = sbr.rel (0) target = $region21
    $region20: #{tpu_custom_call.1} parent=1 // pred_region
      %59 = vsyncadd [#allocation9], 0
      %s60 = sshll.u32 %s4, 4
      %s61 = int_to_ptr.hbm [resolvable:$true] %s60
      %s62 = sshll.u32 [#allocation8], 4
      %s63 = int_to_ptr.vmem [resolvable:$true] %s62
      %68 = dma.hbm_to_vmem [thread:$0]  %s61, 1024, %s63, [#allocation9], 64, 64, 4
    $region21: #{tpu_custom_call.1} parent=1 // pred_fallthru
      _
    // Predicated region
    $region22: #{tpu_custom_call.1} parent=1 // pred_check
      _
    $region23: #{tpu_custom_call.1} parent=1 // pred_check_branch
      %70 = sbr.rel (0) target = $region25
    $region24: #{tpu_custom_call.1} parent=1 // pred_region
      _
    $region25: #{tpu_custom_call.1} parent=1 // pred_fallthru
      _
    // Predicated region
    $region26: #{tpu_custom_call.1} parent=1 // pred_check
      _
    $region27: #{tpu_custom_call.1} parent=1 // pred_check_branch
      %72 = sbr.rel (0) target = $region29
    $region28: #{tpu_custom_call.1} parent=1 // pred_region
      %74 = dma.done [#allocation3], 256
    $region29: #{tpu_custom_call.1} parent=1 // pred_fallthru
      _
    // Predicated region
    $region30: #{tpu_custom_call.1} parent=1 // pred_check
      _
    $region31: #{tpu_custom_call.1} parent=1 // pred_check_branch
      %76 = sbr.rel (0) target = $region33
    $region32: #{tpu_custom_call.1} parent=1 // pred_region
      %78 = dma.done [#allocation6], 256
    $region33: #{tpu_custom_call.1} parent=1 // pred_fallthru
      _
    // Predicated region
    $region34: #{tpu_custom_call.1} parent=1 // pred_check
      _
    $region35: #{tpu_custom_call.1} parent=1 // pred_check_branch
      %80 = sbr.rel (0) target = $region37
    $region36: #{tpu_custom_call.1} parent=1 // pred_region
      %82 = dma.done [#allocation6], 1024
    $region37: #{tpu_custom_call.1} parent=1 // pred_fallthru
      _
    // Predicated region
    $region38: #{tpu_custom_call.1} parent=1 // pred_check
      _
    $region39: #{tpu_custom_call.1} parent=1 // pred_check_branch
      %84 = sbr.rel (0) target = $region41
    $region40: #{tpu_custom_call.1} parent=1 // pred_region
      %86 = dma.done [#allocation9], 1024
    $region41: #{tpu_custom_call.1} parent=1 // pred_fallthru
      _
    %v87 = vld [vmem:[#allocation2] sm:$0xff]
    %v88 = vld [vmem:[#allocation2 + $0x8] sm:$0xff]
    %89 = vadd.xlane.f32.xlu0 %v87
    %v90 = vpop.xlane.xlu0 %89
    %91 = vadd.xlane.f32.xlu0 %v88
    %v92 = vpop.xlane.xlu0 %91
    %v93 = vrcp.pop 128.0
    %v94 = vmul.f32 128.0, %v93
    %v95 = vsub.f32 1.0, %v94
    %v96 = vmul.f32 %v93, %v95
    %v97 = vadd.f32 %v93, %v96
    %vm98 = vweird.f32 %v93
    %v99 = vsel %vm98, %v93, %v97
    %v100 = vmul.f32 %v90, %v99
    %v101 = vmul.f32 %v92, %v99
    %v102 = vsub.f32 %v87, %v100
    %v103 = vsub.f32 %v88, %v101
    %v104 = vmul.f32 %v102, %v102
    %v105 = vmul.f32 %v103, %v103
    %106 = vadd.xlane.f32.xlu0 %v104
    %v107 = vpop.xlane.xlu0 %106
    %108 = vadd.xlane.f32.xlu0 %v105
    %v109 = vpop.xlane.xlu0 %108
    %v110 = vmul.f32 %v107, %v99
    %v111 = vmul.f32 %v109, %v99
    %v112 = vadd.f32 %v110, 1e-05
    %v113 = vadd.f32 %v111, 1e-05
    %v114 = vrsqrt.pop %v112
    %v115 = vmul.f32 %v114, %v112
    %v116 = vmul.f32 %v115, %v114
    %v117 = vmul.f32 0.5, %v116
    %v118 = vsub.f32 1.5, %v117
    %v119 = vmul.f32 %v114, %v118
    %vm120 = vweird.f32 %v112
    %vm121 = vweird.f32 %v114
    %vm122 = vmor %vm120, %vm121
    %v123 = vsel %vm122, %v114, %v119
    %v124 = vrsqrt.pop %v113
    %v125 = vmul.f32 %v124, %v113
    %v126 = vmul.f32 %v125, %v124
    %v127 = vmul.f32 0.5, %v126
    %v128 = vsub.f32 1.5, %v127
    %v129 = vmul.f32 %v124, %v128
    %vm130 = vweird.f32 %v113
    %vm131 = vweird.f32 %v124
    %vm132 = vmor %vm130, %vm131
    %v133 = vsel %vm132, %v124, %v129
    %v134 = vmul.f32 %v102, %v123
    %v135 = vmul.f32 %v103, %v133
    %v136 = vpack.c.bf16 %v135, %v134
    %v137 = vld [vmem:[#allocation7] sm:$0xf]
    %v138 = vld [vmem:[#allocation7 + $0x4] sm:$0xf]
    %v139 = vld [vmem:[#allocation7 + $0x8] sm:$0xf]
    %v140 = vld [vmem:[#allocation7 + $0xc] sm:$0xf]
    %v141 = vld [vmem:[#allocation7 + $0x10] sm:$0xf]
    %v142 = vld [vmem:[#allocation7 + $0x14] sm:$0xf]
    %v143 = vld [vmem:[#allocation7 + $0x18] sm:$0xf]
    %v144 = vld [vmem:[#allocation7 + $0x1c] sm:$0xf]
    %v145 = vld [vmem:[#allocation7 + $0x20] sm:$0xf]
    %v146 = vld [vmem:[#allocation7 + $0x24] sm:$0xf]
    %v147 = vld [vmem:[#allocation7 + $0x28] sm:$0xf]
    %v148 = vld [vmem:[#allocation7 + $0x2c] sm:$0xf]
    %v149 = vld [vmem:[#allocation7 + $0x30] sm:$0xf]
    %v150 = vld [vmem:[#allocation7 + $0x34] sm:$0xf]
    %v151 = vld [vmem:[#allocation7 + $0x38] sm:$0xf]
    %v152 = vld [vmem:[#allocation7 + $0x3c] sm:$0xf]
    %v153 = vld [vmem:[%s3] sm:$0x1]
    %v155 = vperm.slane %v153, 0
    %v173 = vunpack.c.l.b16 %v137
    %v174 = vunpack.c.l.b16 %v138
    %v175 = vunpack.c.l.b16 %v139
    %v176 = vunpack.c.l.b16 %v140
    %v177 = vunpack.c.l.b16 %v141
    %v178 = vunpack.c.l.b16 %v142
    %v179 = vunpack.c.l.b16 %v143
    %v180 = vunpack.c.l.b16 %v144
    %v181 = vunpack.c.l.b16 %v145
    %v182 = vunpack.c.l.b16 %v146
    %v183 = vunpack.c.l.b16 %v147
    %v184 = vunpack.c.l.b16 %v148
    %v185 = vunpack.c.l.b16 %v149
    %v186 = vunpack.c.l.b16 %v150
    %v187 = vunpack.c.l.b16 %v151
    %v188 = vunpack.c.l.b16 %v152
    %v189 = vpack.c.b16 %v174, %v173
    %v190 = vpack.c.b16 %v176, %v175
    %v191 = vpack.c.b16 %v178, %v177
    %v192 = vpack.c.b16 %v180, %v179
    %v193 = vpack.c.b16 %v182, %v181
    %v194 = vpack.c.b16 %v184, %v183
    %v195 = vpack.c.b16 %v186, %v185
    %v196 = vpack.c.b16 %v188, %v187
    %205 = vmatpush.bf16.msra.mxu0 %v196
    %206 = vmatpush.bf16.msra.mxu0 %v195
    %207 = vmatpush.bf16.msra.mxu0 %v194
    %208 = vmatpush.bf16.msra.mxu0 %v193
    %209 = vmatpush.bf16.msra.mxu0 %v192
    %210 = vmatpush.bf16.msra.mxu0 %v191
    %211 = vmatpush.bf16.msra.mxu0 %v190
    %212 = vmatpush.bf16.msra.mxu0 %v189
    %213 = vmatmul.bf16.gmra.mxu0 %v136
    %v214 = vpop.f32.mrf.mxu0
    %v215 = vadd.f32 %v155, %v214
    %v216 = vpop.f32.mrf.mxu0
    %v217 = vadd.f32 %v155, %v216
    %218 = vdwg.mxu0
    %v219 = vmul.f32 %v215, 0.5
    %v220 = vmul.f32 %v217, 0.5
    %v221 = vmul.f32 %v215, 0.70710677
    %v222 = vmul.f32 %v217, 0.70710677
    %v223 = vmul.f32 %v221, %v221
    %v224 = vmin.f32 16.0, %v223
    %v225 = vmul.f32 %v224, 2.1237322e-06
    %v226 = vadd.f32 %v225, 0.00028619796
    %v227 = vmul.f32 %v224, %v226
    %v228 = vadd.f32 %v227, 0.0036580483
    %v229 = vmul.f32 %v224, %v228
    %v230 = vadd.f32 %v229, 0.05243302
    %v231 = vmul.f32 %v224, %v230
    %v232 = vadd.f32 %v231, 0.18741608
    %v233 = vmul.f32 %v224, %v232
    %v234 = vadd.f32 %v233, 1.1283791
    %v235 = vmul.f32 %v221, %v234
    %v236 = vmul.f32 %v224, 3.8918573e-05
    %v237 = vadd.f32 %v236, 0.001143296
    %v238 = vmul.f32 %v224, %v237
    %v239 = vadd.f32 %v238, 0.014752088
    %v240 = vmul.f32 %v224, %v239
    %v241 = vadd.f32 %v240, 0.112945676
    %v242 = vmul.f32 %v224, %v241
    %v243 = vadd.f32 %v242, 0.4994258
    %v244 = vmul.f32 %v224, %v243
    %v245 = vadd.f32 %v244, 1.0
    %v246 = vrcp.pop %v245
    %v247 = vmul.f32 %v245, %v246
    %v248 = vsub.f32 1.0, %v247
    %v249 = vmul.f32 %v246, %v248
    %v250 = vadd.f32 %v246, %v249
    %vm251 = vweird.f32 %v245
    %vm252 = vweird.f32 %v246
    %vm253 = vmor %vm251, %vm252
    %v254 = vsel %vm253, %v246, %v250
    %v255 = vand.u32 2147483647, %v245
    %vm256 = vcmp.eq.f32.partialorder %v255, 8.507059e+37
    %v257 = vand.u32 %v245, 2147483648
    %v258 = vor.u32 1.1754944e-38, %v257
    %v259 = vsel %vm256, %v258, %v254
    %v260 = vmul.f32 %v235, %v259
    %v261 = vmin.f32 %v260, 1.0
    %v262 = vmax.f32 %v261, -1.0
    %v263 = vmul.f32 %v222, %v222
    %v264 = vmin.f32 16.0, %v263
    %v265 = vmul.f32 %v264, 2.1237322e-06
    %v266 = vadd.f32 %v265, 0.00028619796
    %v267 = vmul.f32 %v264, %v266
    %v268 = vadd.f32 %v267, 0.0036580483
    %v269 = vmul.f32 %v264, %v268
    %v270 = vadd.f32 %v269, 0.05243302
    %v271 = vmul.f32 %v264, %v270
    %v272 = vadd.f32 %v271, 0.18741608
    %v273 = vmul.f32 %v264, %v272
    %v274 = vadd.f32 %v273, 1.1283791
    %v275 = vmul.f32 %v222, %v274
    %v276 = vmul.f32 %v264, 3.8918573e-05
    %v277 = vadd.f32 %v276, 0.001143296
    %v278 = vmul.f32 %v264, %v277
    %v279 = vadd.f32 %v278, 0.014752088
    %v280 = vmul.f32 %v264, %v279
    %v281 = vadd.f32 %v280, 0.112945676
    %v282 = vmul.f32 %v264, %v281
    %v283 = vadd.f32 %v282, 0.4994258
    %v284 = vmul.f32 %v264, %v283
    %v285 = vadd.f32 %v284, 1.0
    %v286 = vrcp.pop %v285
    %v287 = vmul.f32 %v285, %v286
    %v288 = vsub.f32 1.0, %v287
    %v289 = vmul.f32 %v286, %v288
    %v290 = vadd.f32 %v286, %v289
    %vm291 = vweird.f32 %v285
    %vm292 = vweird.f32 %v286
    %vm293 = vmor %vm291, %vm292
    %v294 = vsel %vm293, %v286, %v290
    %v295 = vand.u32 2147483647, %v285
    %vm296 = vcmp.eq.f32.partialorder %v295, 8.507059e+37
    %v297 = vand.u32 %v285, 2147483648
    %v298 = vor.u32 1.1754944e-38, %v297
    %v299 = vsel %vm296, %v298, %v294
    %v300 = vmul.f32 %v275, %v299
    %v301 = vmin.f32 %v300, 1.0
    %v302 = vmax.f32 %v301, -1.0
    %v303 = vadd.f32 %v262, 1.0
    %v304 = vadd.f32 %v302, 1.0
    %v305 = vmul.f32 %v219, %v303
    %v306 = vmul.f32 %v220, %v304
    %v307 = vpack.c.bf16 %v306, %v305
    %v308 = vld [vmem:[#allocation8] sm:$0xf]
    %v309 = vld [vmem:[#allocation8 + $0x4] sm:$0xf]
    %v310 = vld [vmem:[#allocation8 + $0x8] sm:$0xf]
    %v311 = vld [vmem:[#allocation8 + $0xc] sm:$0xf]
    %v312 = vld [vmem:[#allocation8 + $0x10] sm:$0xf]
    %v313 = vld [vmem:[#allocation8 + $0x14] sm:$0xf]
    %v314 = vld [vmem:[#allocation8 + $0x18] sm:$0xf]
    %v315 = vld [vmem:[#allocation8 + $0x1c] sm:$0xf]
    %v316 = vld [vmem:[#allocation8 + $0x20] sm:$0xf]
    %v317 = vld [vmem:[#allocation8 + $0x24] sm:$0xf]
    %v318 = vld [vmem:[#allocation8 + $0x28] sm:$0xf]
    %v319 = vld [vmem:[#allocation8 + $0x2c] sm:$0xf]
    %v320 = vld [vmem:[#allocation8 + $0x30] sm:$0xf]
    %v321 = vld [vmem:[#allocation8 + $0x34] sm:$0xf]
    %v322 = vld [vmem:[#allocation8 + $0x38] sm:$0xf]
    %v323 = vld [vmem:[#allocation8 + $0x3c] sm:$0xf]
    %v324 = vld [vmem:[%s5] sm:$0x1]
    %v326 = vperm.slane %v324, 0
    %v344 = vunpack.c.l.b16 %v308
    %v345 = vunpack.c.l.b16 %v309
    %v346 = vunpack.c.l.b16 %v310
    %v347 = vunpack.c.l.b16 %v311
    %v348 = vunpack.c.l.b16 %v312
    %v349 = vunpack.c.l.b16 %v313
    %v350 = vunpack.c.l.b16 %v314
    %v351 = vunpack.c.l.b16 %v315
    %v352 = vunpack.c.l.b16 %v316
    %v353 = vunpack.c.l.b16 %v317
    %v354 = vunpack.c.l.b16 %v318
    %v355 = vunpack.c.l.b16 %v319
    %v356 = vunpack.c.l.b16 %v320
    %v357 = vunpack.c.l.b16 %v321
    %v358 = vunpack.c.l.b16 %v322
    %v359 = vunpack.c.l.b16 %v323
    %v360 = vpack.c.b16 %v345, %v344
    %v361 = vpack.c.b16 %v347, %v346
    %v362 = vpack.c.b16 %v349, %v348
    %v363 = vpack.c.b16 %v351, %v350
    %v364 = vpack.c.b16 %v353, %v352
    %v365 = vpack.c.b16 %v355, %v354
    %v366 = vpack.c.b16 %v357, %v356
    %v367 = vpack.c.b16 %v359, %v358
    %376 = vmatpush.bf16.msra.mxu0 %v367
    %377 = vmatpush.bf16.msra.mxu0 %v366
    %378 = vmatpush.bf16.msra.mxu0 %v365
    %379 = vmatpush.bf16.msra.mxu0 %v364
    %380 = vmatpush.bf16.msra.mxu0 %v363
    %381 = vmatpush.bf16.msra.mxu0 %v362
    %382 = vmatpush.bf16.msra.mxu0 %v361
    %383 = vmatpush.bf16.msra.mxu0 %v360
    %384 = vmatmul.bf16.gmra.mxu0 %v307
    %v385 = vpop.f32.mrf.mxu0
    %v386 = vadd.f32 %v326, %v385
    %v387 = vpop.f32.mrf.mxu0
    %v388 = vadd.f32 %v326, %v387
    %389 = vdwg.mxu0
    %v390 = vld [vmem:[#allocation5] sm:$0xff]
    %v391 = vld [vmem:[#allocation5 + $0x8] sm:$0xff]
    %v392 = vadd.f32 %v390, %v386
    %v393 = vadd.f32 %v391, %v388
    %394 = vst [vmem:[#allocation10] sm:$0xff] %v392
    %395 = vst [vmem:[#allocation10 + $0x8] sm:$0xff] %v393
    // Predicated region
    $region42: #{tpu_custom_call.1} parent=1 // pred_check
      _
    $region43: #{tpu_custom_call.1} parent=1 // pred_check_branch
      %397 = sbr.rel (0) target = $region45
    $region44: #{tpu_custom_call.1} parent=1 // pred_region
      %399 = vsyncadd [#allocation4], 0
      %s400 = sshll.u32 [#allocation10], 4
      %s401 = int_to_ptr.vmem [resolvable:$true] %s400
      %s402 = sshll.u32 %s6, 4
      %s403 = int_to_ptr.hbm [resolvable:$true] %s402
      %408 = dma.vmem_to_hbm [thread:$0]  %s401, 256, %s403, [#allocation4], 128, 128, 8
    $region45: #{tpu_custom_call.1} parent=1 // pred_fallthru
      _
    // Predicated region
    $region46: #{tpu_custom_call.1} parent=1 // pred_check
      _
    $region47: #{tpu_custom_call.1} parent=1 // pred_check_branch
      %410 = sbr.rel (0) target = $region49
    $region48: #{tpu_custom_call.1} parent=1 // pred_region
      %412 = dma.done [#allocation4], 256
    $region49: #{tpu_custom_call.1} parent=1 // pred_fallthru
      _
    %413 = vsyncpa [#allocation3], 1
    %414 = vsyncpa [#allocation6], 1
    %415 = vsyncpa [#allocation9], 1
    %416 = vsyncpa [#allocation4], 1

</llo_original>
